<compile_context>
chip_gen: v5e
topology: v5e:2x2
jax: 0.10.0
libtpu: 0.0.40
codegen_flags: <defaults>
</compile_context>

<pallas_src>
import jax
import jax.numpy as jnp
from jax import lax
from jax.experimental import pallas as pl
from jax.experimental.pallas import tpu as pltpu


def _portfolio_kernel(e_ref, w_ref, at_ref):
    # e_ref  : (Bt, N, H)  hidden features for Bt batch elements
    # w_ref  : (M, H)      linear weight (torch layout), resident across the grid
    # at_ref : (Bt, M, N)  transposed portfolio weights (lane-dense in N)
    w = w_ref[...]
    bt = e_ref.shape[0]
    for b in range(bt):  # static unroll; Bt is small by construction
        # (M,H) x (N,H) contracted over H -> (M, N); f32 accumulation on the MXU.
        logits_t = lax.dot_general(
            w, e_ref[b],
            dimension_numbers=(((1,), (1,)), ((), ())),
            preferred_element_type=jnp.float32,
        )
        # Softmax over N == last (lane) axis of this tile == torch Softmax(dim=1).
        m = jnp.max(logits_t, axis=-1, keepdims=True)
        p = jnp.exp(logits_t - m)
        denom = jnp.sum(p, axis=-1, keepdims=True)
        at_ref[b] = (p * pl.reciprocal(denom, approx=True)).astype(at_ref.dtype)


def _pick_batch_tile(B, N, H, M, in_itemsize, out_itemsize,
                     vmem_budget_bytes=8 * 1024 * 1024):
    """Largest Bt dividing B that fits the VMEM budget and keeps >= 2 grid steps."""
    # Double-buffered input + output per batch element (W is tiny and resident).
    per_batch = 2 * (N * H * in_itemsize + M * N * out_itemsize)
    cap = max(1, vmem_budget_bytes // max(per_batch, 1))
    if B >= 2:
        cap = min(cap, B // 2)  # keep >= 2 steps so v7x can split across its 2 TCs
    bt = 1
    for d in range(1, B + 1):
        if B % d == 0 and d <= cap:
            bt = d
    return bt


def portfolio_layer(e: jax.Array, weight: jax.Array, bias: jax.Array = None) -> jax.Array:
    """Pallas implementation of PortfolioLayer.forward.

    e      : [B, N, H]   (f32 or bf16)
    weight : [M, H]      (torch nn.Linear convention)
    bias   : [M]         (accepted for API parity; softmax over dim=1 is invariant
                          to a per-portfolio constant, so it is not needed)
    returns: [B, N, M]   (f32)
    """
    del bias  # softmax(dim=1) invariance: bias[m] is constant along the N axis.
    B, N, H = e.shape
    M = weight.shape[0]
    w = weight.astype(e.dtype)  # tiny; match MXU input dtype to e (no pass over e)

    out_dtype = jnp.float32
    bt = _pick_batch_tile(B, N, H, M,
                          jnp.dtype(e.dtype).itemsize,
                          jnp.dtype(out_dtype).itemsize)

    grid_spec = pltpu.PrefetchScalarGridSpec(
        num_scalar_prefetch=0,
        grid=(B // bt,),
        in_specs=[
            pl.BlockSpec((bt, N, H), lambda i: (i, 0, 0)),   # e: Bt batches per step
            pl.BlockSpec((M, H), lambda i: (0, 0)),          # W: resident
        ],
        out_specs=pl.BlockSpec((bt, M, N), lambda i: (i, 0, 0)),
    )

    a_t = pl.pallas_call(
        _portfolio_kernel,
        out_shape=jax.ShapeDtypeStruct((B, M, N), out_dtype),
        grid_spec=grid_spec,
        compiler_params=pltpu.CompilerParams(
            dimension_semantics=("parallel",)),
    )(e, w)

    # Consumer-facing layout matches the PyTorch module: [B, N, M].
    # TODO(synk): if the downstream consumer can take (B, M, N) directly, drop
    # this transpose and save one extra HBM pass.
    return jnp.transpose(a_t, (0, 2, 1))


if __name__ == "__main__":
    # Small shapes consistent with the module: B batches, N stocks, H hidden, M portfolios.
    B, N, H, M = 2, 16, 32, 8

    key = jax.random.PRNGKey(0)
    k_e, k_w, k_b = jax.random.split(key, 3)

    e = jax.random.normal(k_e, (B, N, H), dtype=jnp.float32)
    bound = 1.0 / (H ** 0.5)
    weight = jax.random.uniform(k_w, (M, H), minval=-bound, maxval=bound,
                                dtype=jnp.float32)
    bias = jax.random.uniform(k_b, (M,), minval=-bound, maxval=bound,
                              dtype=jnp.float32)

    # --- f32 path ---
    a = jax.block_until_ready(portfolio_layer(e, weight, bias))

    # Reference includes the bias; the kernel omits it because softmax over dim=1
    # is invariant to a per-portfolio constant — results must still match.
    logits_ref = jnp.einsum("bnh,mh->bnm", e, weight) + bias
    a_ref = jax.nn.softmax(logits_ref, axis=1)
    assert a.shape == (B, N, M)
    assert jnp.allclose(a, a_ref, atol=1e-3, rtol=1e-2)
    # Columns (over N) must sum to ~1 (approx reciprocal -> loose tolerance).
    assert jnp.allclose(jnp.sum(a, axis=1), jnp.ones((B, M)), atol=5e-3)

    # --- bf16 path (halves HBM traffic; accumulation stays f32 on the MXU) ---
    e_bf = e.astype(jnp.bfloat16)
    w_bf = weight.astype(jnp.bfloat16)
    a_bf = jax.block_until_ready(portfolio_layer(e_bf, w_bf, bias))
    logits_bf_ref = jnp.einsum("bnh,mh->bnm",
                               e_bf.astype(jnp.float32), w_bf.astype(jnp.float32))
    a_bf_ref = jax.nn.softmax(logits_bf_ref, axis=1)
    assert a_bf.shape == (B, N, M)
    assert jnp.allclose(a_bf, a_bf_ref, atol=1e-2, rtol=1e-2)

    print("KERNEL_OK")
</pallas_src>

<mosaic_0001>
module attributes {stable_mosaic.version = 11 : i64} {
  func.func @_portfolio_kernel(%arg0: i32, %arg1: memref<1x16x32xf32, #tpu.memory_space<vmem>>, %arg2: memref<8x32xf32, #tpu.memory_space<vmem>>, %arg3: memref<1x8x16xf32, #tpu.memory_space<vmem>>) attributes {dimension_semantics = [#tpu.dimension_semantics<parallel>], iteration_bounds = array<i64: 2>, scalar_prefetch = 0 : i64, scratch_operands = 0 : i64, tpu.core_type = #tpu.core_type<tc>, window_params = [{transform_indices = @transform_0, window_bounds = array<i64: 1, 16, 32>}, {pipeline_mode = #tpu.pipeline_mode<synchronous>, transform_indices = @transform_1, window_bounds = array<i64: 8, 32>}, {transform_indices = @transform_2, window_bounds = array<i64: 1, 8, 16>}]} {
    %c0 = arith.constant 0 : index
    %c0_0 = arith.constant 0 : index
    %0 = vector.load %arg2[%c0, %c0_0] : memref<8x32xf32, #tpu.memory_space<vmem>>, vector<8x32xf32>
    %c0_1 = arith.constant 0 : index
    %c0_2 = arith.constant 0 : index
    %c0_3 = arith.constant 0 : index
    %1 = vector.load %arg1[%c0_1, %c0_2, %c0_3] : memref<1x16x32xf32, #tpu.memory_space<vmem>>, vector<1x16x32xf32>
    %2 = vector.shape_cast %1 : vector<1x16x32xf32> to vector<16x32xf32>
    %cst = arith.constant dense<0.000000e+00> : vector<8x16xf32>
    %3 = tpu.matmul %0, %2, %cst {dimension_numbers = #tpu.dot_dimension_numbers<[1], [1], [0], [0], [0, 0, 1, 0], [], []>} : vector<8x32xf32>, vector<16x32xf32>, vector<8x16xf32> -> vector<8x16xf32>
    %cst_4 = arith.constant dense<0xFF800000> : vector<8xf32>
    %4 = vector.multi_reduction <maximumf>, %3, %cst_4 [1] : vector<8x16xf32> to vector<8xf32>
    %5 = vector.shape_cast %4 : vector<8xf32> to vector<8x1xf32>
    %6 = vector.broadcast %5 : vector<8x1xf32> to vector<8x16xf32>
    %7 = arith.subf %3, %6 : vector<8x16xf32>
    %8 = math.exp %7 : vector<8x16xf32>
    %cst_5 = arith.constant dense<0.000000e+00> : vector<8xf32>
    %9 = vector.multi_reduction <add>, %8, %cst_5 [1] : vector<8x16xf32> to vector<8xf32>
    %10 = vector.shape_cast %9 : vector<8xf32> to vector<8x1xf32>
    %11 = tpu.reciprocal %10 {approx = true} : vector<8x1xf32> -> vector<8x1xf32>
    %12 = vector.broadcast %11 : vector<8x1xf32> to vector<8x16xf32>
    %13 = arith.mulf %8, %12 : vector<8x16xf32>
    %c0_6 = arith.constant 0 : index
    %c0_7 = arith.constant 0 : index
    %c0_8 = arith.constant 0 : index
    %14 = vector.load %arg3[%c0_6, %c0_7, %c0_8] : memref<1x8x16xf32, #tpu.memory_space<vmem>>, vector<1x8x16xf32>
    %15 = vector.shape_cast %14 : vector<1x8x16xf32> to vector<8x16xf32>
    %16 = vector.shape_cast %13 : vector<8x16xf32> to vector<1x8x16xf32>
    tpu.vector_store %arg3[%c0_6, %c0_7, %c0_8], %16 {strides = array<i32>} : memref<1x8x16xf32, #tpu.memory_space<vmem>>, vector<1x8x16xf32>,
    return
  }
  func.func @transform_0(%arg0: i32) -> (i32, i32, i32) {
    %c0_i32 = arith.constant 0 : i32
    %c0_i32_0 = arith.constant 0 : i32
    %c0_i32_1 = arith.constant 0 : i32
    return %arg0, %c0_i32, %c0_i32_0 : i32, i32, i32
  }
  func.func @transform_1(%arg0: i32) -> (i32, i32) {
    %c0_i32 = arith.constant 0 : i32
    %c0_i32_0 = arith.constant 0 : i32
    %c0_i32_1 = arith.constant 0 : i32
    return %c0_i32, %c0_i32_0 : i32, i32
  }
  func.func @transform_2(%arg0: i32) -> (i32, i32, i32) {
    %c0_i32 = arith.constant 0 : i32
    %c0_i32_0 = arith.constant 0 : i32
    %c0_i32_1 = arith.constant 0 : i32
    return %arg0, %c0_i32, %c0_i32_0 : i32, i32, i32
  }
}

</mosaic_0001>

<llo_original>
// kernel: tpu_custom_call.1
$region0: #{tpu_custom_call.1}
  #allocation0 [shape = 'u32[]', space=smem, size = 0x4, offset = 0x4, fixed_abs, tag = 'smem constant byte address 0x4 - core index']
  #allocation1 [shape = 'u32[72,128]{1,0:T(1,128)}', space=vmem, size = 0x9000, scoped, tag = 'internal scratch']
  %s0 = inlined_call_operand.hbm [shape: f32[2,16,32], index: 0, kind: input, shape index: {}]
  %s1 = inlined_call_operand.hbm [shape: f32[8,32], index: 1, kind: input, shape index: {}]
  %s2 = inlined_call_operand.hbm [shape: f32[2,8,16], index: 2, kind: output, shape index: {}]
  %s3 = sld [smem:[#allocation0]]
  $region49: #{tpu_custom_call.1} parent=0
    _
  %s5 = ssub.s32 1, %s3
  %s6 = scalar_select 0, %s5, %s3
  $region1: #{tpu_custom_call.1} parent=0
    #allocation2 [shape = 'u8[16384]{0}', space=vmem, size = 0x4000, scoped, tag = 'input window, operand 0']
    #allocation3 [shape = 's32[2]{0}', space=sflag, size = 0x8, scoped, tag = 'scoped memory for tpu_custom_call.1']
    #allocation4 [shape = 's32[2]{0}', space=sflag, size = 0x8, scoped, tag = 'scoped memory for tpu_custom_call.1']
    #allocation5 [shape = 'u8[4096]{0}', space=vmem, size = 0x1000, scoped, tag = 'input window, operand 1, single buffered']
    #allocation6 [shape = 's32[1]{0}', space=sflag, size = 0x4, scoped, tag = 'scoped memory for tpu_custom_call.1']
    #allocation7 [shape = 'u8[8192]{0}', space=vmem, size = 0x2000, scoped, tag = 'output window, operand 0']
    %7 = vsyncpa [#allocation3], 0
    %s8 = scalar_lea.sflag [#allocation3], 1
    %9 = vsyncpa %s8, 0
    %10 = vsyncpa [#allocation6], 0
    %11 = vsyncpa [#allocation4], 0
    %s12 = scalar_lea.sflag [#allocation4], 1
    %13 = vsyncpa %s12, 0
    loop: start=0, step=1, limit=4
    $region2: #{tpu_custom_call.1} parent=1 // loop_pre_header
      _
    $region3: #{tpu_custom_call.1} parent=1 // loop_header
      %s15 = sphi 0, %s19
      %p16 = scmp.ge.s32.totalorder %s15, 4
      %s25 = sphi 0, %s27
      %s28 = sphi 0, %s25
      %s29 = sphi 0, %s28
      %s45 = sphi 0, %s29
      %s49 = sphi 0, %s49
      %s51 = sphi 0, %s49
      %s52 = sphi 0, %s51
      %s66 = sphi 0, %s52
      %s72 = sphi 0, %s74
      %s75 = sphi 0, %s72
      %s76 = sphi 0, %s75
      %s92 = sphi 0, %s76
    $region4: #{tpu_custom_call.1} parent=1 // loop_header_branch
      %18 = sbr.rel (%p16) target = $region8
    $region5: #{tpu_custom_call.1} parent=1 // loop_body
      %s20 = ssub.s32 %s15, 1
      %s21 = ssub.s32 %s15, 2
      %s22 = sadd.s32 %s15, 1
      %s23 = ssub.s32 %s15, %s22
      %p24 = scmp.eq.s32.totalorder %s23, 0
      %s26 = sadd.s32 %s25, 1
      %s27 = scalar_select %p24, %s25, %s26
      %p30 = pneg %p24
      %p31 = scmp.eq.s32.totalorder %s15, 1
      %p32 = por %p30, %p31
      %p33 = scmp.ne.s32.totalorder %s25, %s28
      %p34 = scmp.eq.s32.totalorder %s15, 0
      %p35 = por %p33, %p34
      %p36 = scmp.ne.s32.totalorder %s25, %s28
      %p37 = scmp.eq.s32.totalorder %s20, 1
      %p38 = por %p36, %p37
      %p39 = scmp.ne.s32.totalorder %s28, %s29
      %p40 = scmp.eq.s32.totalorder %s20, 0
      %p41 = por %p39, %p40
      %p42 = scmp.ne.s32.totalorder %s28, %s29
      %p43 = scmp.eq.s32.totalorder %s21, 1
      %p44 = por %p42, %p43
      %p46 = scmp.ne.s32.totalorder %s29, %s45
      %p47 = scmp.eq.s32.totalorder %s21, 0
      %p48 = por %p46, %p47
      %s50 = sadd.s32 %s49, 1
      %p53 = scmp.eq.s32.totalorder %s15, 1
      %p54 = scmp.ne.s32.totalorder %s49, %s51
      %p55 = scmp.eq.s32.totalorder %s15, 0
      %p56 = por %p54, %p55
      %p57 = scmp.ne.s32.totalorder %s49, %s51
      %p58 = scmp.eq.s32.totalorder %s20, 1
      %p59 = por %p57, %p58
      %p60 = scmp.ne.s32.totalorder %s51, %s52
      %p61 = scmp.eq.s32.totalorder %s20, 0
      %p62 = por %p60, %p61
      %p63 = scmp.ne.s32.totalorder %s51, %s52
      %p64 = scmp.eq.s32.totalorder %s21, 1
      %p65 = por %p63, %p64
      %p67 = scmp.ne.s32.totalorder %s52, %s66
      %p68 = scmp.eq.s32.totalorder %s21, 0
      %p69 = por %p67, %p68
      %s70 = ssub.s32 %s15, %s22
      %p71 = scmp.eq.s32.totalorder %s70, 0
      %s73 = sadd.s32 %s72, 1
      %s74 = scalar_select %p71, %s72, %s73
      %p77 = pneg %p71
      %p78 = scmp.eq.s32.totalorder %s15, 1
      %p79 = por %p77, %p78
      %p80 = scmp.ne.s32.totalorder %s72, %s75
      %p81 = scmp.eq.s32.totalorder %s15, 0
      %p82 = por %p80, %p81
      %p83 = scmp.ne.s32.totalorder %s72, %s75
      %p84 = scmp.eq.s32.totalorder %s20, 1
      %p85 = por %p83, %p84
      %p86 = scmp.ne.s32.totalorder %s75, %s76
      %p87 = scmp.eq.s32.totalorder %s20, 0
      %p88 = por %p86, %p87
      %p89 = scmp.ne.s32.totalorder %s75, %s76
      %p90 = scmp.eq.s32.totalorder %s21, 1
      %p91 = por %p89, %p90
      %p93 = scmp.ne.s32.totalorder %s76, %s92
      %p94 = scmp.eq.s32.totalorder %s21, 0
      %p95 = por %p93, %p94
      %p96 = scmp.le.s32.totalorder 1, %s15
      %p97 = scmp.lt.s32.totalorder %s15, 3
      %p98 = pnand %p96, %p97
      %p99 = pneg %p98
      // Predicated region
      $region9: #{tpu_custom_call.1} parent=5 // pred_check
        _
      $region10: #{tpu_custom_call.1} parent=5 // pred_check_branch
        %101 = sbr.rel (%p98) target = $region12
      $region11: #{tpu_custom_call.1} parent=5 // pred_region
        %s102 = ssub.s32 %s15, 1
        // Predicated region
        $region13: #{tpu_custom_call.1} parent=11 // pred_check
          %p103 = pneg %p62
        $region14: #{tpu_custom_call.1} parent=11 // pred_check_branch
          %105 = sbr.rel (%p103) target = $region16
        $region15: #{tpu_custom_call.1} parent=11 // pred_region
          %107 = vsyncadd [#allocation6], 0
          %s109 = sshll.u32 %s1, 4
          %s110 = int_to_ptr.hbm [resolvable:$true] %s109
          %s111 = sshll.u32 [#allocation5], 4
          %s112 = int_to_ptr.vmem [resolvable:$true] %s111
          %114 = dma.hbm_to_vmem [thread:$0]  %s110, 128, %s112, [#allocation6]
        $region16: #{tpu_custom_call.1} parent=11 // pred_fallthru
          _
      $region12: #{tpu_custom_call.1} parent=5 // pred_fallthru
        _
      %p115 = scmp.lt.s32.totalorder %s15, 2
      // Predicated region
      $region17: #{tpu_custom_call.1} parent=5 // pred_check
        %p116 = pneg %p115
      $region18: #{tpu_custom_call.1} parent=5 // pred_check_branch
        %118 = sbr.rel (%p116) target = $region20
      $region19: #{tpu_custom_call.1} parent=5 // pred_region
        // Predicated region
        $region21: #{tpu_custom_call.1} parent=19 // pred_check
          %p119 = pneg %p35
        $region22: #{tpu_custom_call.1} parent=19 // pred_check_branch
          %121 = sbr.rel (%p119) target = $region24
        $region23: #{tpu_custom_call.1} parent=19 // pred_region
          %s122 = sand.u32 %s25, 1
          %s123 = scalar_lea.sflag [#allocation3], %s122
          %s124 = sand.u32 %s25, 1
          %s125 = smul.addr %s124, 16
          %s126 = scalar_lea.vmem [#allocation2], %s125
          %128 = vsyncadd %s123, 0
          %s129 = smul.addr %s15, 2
          %s130 = smul.addr %s129, 8
          %s131 = scalar_lea.hbm %s0, %s130
          %s132 = sshll.u32 %s131, 4
          %s133 = int_to_ptr.hbm [resolvable:$true] %s132
          %s134 = sshll.u32 %s126, 4
          %s135 = int_to_ptr.vmem [resolvable:$true] %s134
          %140 = dma.hbm_to_vmem [thread:$0]  %s133, 256, %s135, %s123, 128, 128, 8
        $region24: #{tpu_custom_call.1} parent=19 // pred_fallthru
          _
      $region20: #{tpu_custom_call.1} parent=5 // pred_fallthru
        _
      %p141 = scmp.le.s32.totalorder 1, %s15
      %p142 = scmp.lt.s32.totalorder %s15, 3
      %p143 = pnand %p141, %p142
      %p144 = pneg %p143
      // Predicated region
      $region25: #{tpu_custom_call.1} parent=5 // pred_check
        _
      $region26: #{tpu_custom_call.1} parent=5 // pred_check_branch
        %146 = sbr.rel (%p143) target = $region28
      $region27: #{tpu_custom_call.1} parent=5 // pred_region
        %s147 = ssub.s32 %s15, 1
        %s148 = sand.u32 %s28, 1
        %s149 = scalar_lea.sflag [#allocation3], %s148
        %s150 = sand.u32 %s28, 1
        %s151 = smul.addr %s150, 16
        %s152 = scalar_lea.vmem [#allocation2], %s151
        // Predicated region
        $region29: #{tpu_custom_call.1} parent=27 // pred_check
          %p153 = pneg %p41
        $region30: #{tpu_custom_call.1} parent=27 // pred_check_branch
          %155 = sbr.rel (%p153) target = $region32
        $region31: #{tpu_custom_call.1} parent=27 // pred_region
          %157 = dma.done %s149, 256
        $region32: #{tpu_custom_call.1} parent=27 // pred_fallthru
          _
        // Predicated region
        $region33: #{tpu_custom_call.1} parent=27 // pred_check
          %p158 = pneg %p62
        $region34: #{tpu_custom_call.1} parent=27 // pred_check_branch
          %160 = sbr.rel (%p158) target = $region36
        $region35: #{tpu_custom_call.1} parent=27 // pred_region
          %162 = dma.done [#allocation6], 128
        $region36: #{tpu_custom_call.1} parent=27 // pred_fallthru
          _
        %s163 = sand.u32 %s28, 1
        %s164 = scalar_lea.sflag [#allocation3], %s163
        %s165 = sand.u32 %s28, 1
        %s166 = smul.addr %s165, 16
        %s167 = scalar_lea.vmem [#allocation2], %s166
        %p168 = pneg %p41
        %p169 = pneg %p38
        %p170 = pneg %p62
        %p171 = pneg %p59
        %p172 = pneg %p88
        %p173 = pneg %p85
        %s174 = sand.u32 %s75, 1
        %s175 = scalar_lea.sflag [#allocation4], %s174
        %s176 = sand.u32 %s75, 1
        %s177 = smul.addr %s176, 8
        %s178 = scalar_lea.vmem [#allocation7], %s177
        %v179 = vld [vmem:[#allocation5] sm:$0xff]
        %v180 = vld [vmem:[%s152] sm:$0xff]
        %v181 = vld [vmem:[%s152 + $0x8] sm:$0xff]
        %vm182 = vcmask 261120
        %v184 = vsel %vm182, %v179, 0
        %v187 = vsel %vm182, %v180, 0
        %v190 = vsel %vm182, %v181, 0
        %192 = vmatpush.xpose.msra.mxu0 0.0
        %193 = vmatpush.xpose.msra.mxu0 0.0
        %194 = vmatpush.xpose.msra.mxu0 0.0
        %195 = vmatpush.xpose.msra.mxu0 0.0
        %196 = vmatpush.xpose.msra.mxu0 0.0
        %197 = vmatpush.xpose.msra.mxu0 0.0
        %198 = vmatpush.xpose.msra.mxu0 0.0
        %199 = vmatpush.xpose.msra.mxu0 0.0
        %200 = vmatpush.xpose.msra.mxu0 0.0
        %201 = vmatpush.xpose.msra.mxu0 0.0
        %202 = vmatpush.xpose.msra.mxu0 0.0
        %203 = vmatpush.xpose.msra.mxu0 0.0
        %204 = vmatpush.xpose.msra.mxu0 0.0
        %205 = vmatpush.xpose.msra.mxu0 0.0
        %206 = vmatpush.xpose.msra.mxu0 %v190
        %207 = vmatpush.xpose.msra.mxu0 %v187
        %208 = vmatmul.f32.gmra.mxu0 %v184
        %v209 = vpop.f32.mrf.mxu0
        %v210 = vadd.f32 0.0, %v209
        %211 = vdwg.mxu0
        %vm212 = vcmask 130048
        %v213 = vsel %vm212, %v210, -inf
        %214 = vmax.xlane.f32.xlu0 %v213
        %v215 = vpop.xlane.xlu0 %214
        %v216 = vsub.f32 %v210, %v215
        %v217 = vmul.f32 %v216, 1.442695
        %v218 = vpow.pop %v217
        %v219 = vsel %vm212, %v218, 0.0
        %220 = vadd.xlane.f32.xlu0 %v219
        %v221 = vpop.xlane.xlu0 %220
        %v222 = vrcp.pop %v221
        %v223 = vmul.f32 %v218, %v222
        %224 = vst.msk [vmem:[%s178] sm:$0xff] %vm212, %v223
        %s225 = sand.u32 %s75, 1
        %s226 = scalar_lea.sflag [#allocation4], %s225
        %s227 = sand.u32 %s75, 1
        %s228 = smul.addr %s227, 8
        %s229 = scalar_lea.vmem [#allocation7], %s228
        // Predicated region
        $region37: #{tpu_custom_call.1} parent=27 // pred_check
          %p230 = pneg %p85
        $region38: #{tpu_custom_call.1} parent=27 // pred_check_branch
          %232 = sbr.rel (%p230) target = $region40
        $region39: #{tpu_custom_call.1} parent=27 // pred_region
          %234 = vsyncadd %s226, 0
          %s235 = smul.addr %s20, 8
          %s236 = scalar_lea.hbm %s2, %s235
          %s238 = sshll.u32 %s229, 4
          %s239 = int_to_ptr.vmem [resolvable:$true] %s238
          %s240 = sshll.u32 %s236, 4
          %s241 = int_to_ptr.hbm [resolvable:$true] %s240
          %243 = dma.vmem_to_hbm [thread:$0]  %s239, 128, %s241, %s226
        $region40: #{tpu_custom_call.1} parent=27 // pred_fallthru
          _
      $region28: #{tpu_custom_call.1} parent=5 // pred_fallthru
        _
      %p244 = scmp.le.s32.totalorder 2, %s15
      // Predicated region
      $region41: #{tpu_custom_call.1} parent=5 // pred_check
        %p245 = pneg %p244
      $region42: #{tpu_custom_call.1} parent=5 // pred_check_branch
        %247 = sbr.rel (%p245) target = $region44
      $region43: #{tpu_custom_call.1} parent=5 // pred_region
        %s248 = ssub.s32 %s15, 2
        // Predicated region
        $region45: #{tpu_custom_call.1} parent=43 // pred_check
          %p249 = pneg %p91
        $region46: #{tpu_custom_call.1} parent=43 // pred_check_branch
          %251 = sbr.rel (%p249) target = $region48
        $region47: #{tpu_custom_call.1} parent=43 // pred_region
          %s252 = sand.u32 %s76, 1
          %s253 = scalar_lea.sflag [#allocation4], %s252
          %s254 = sand.u32 %s76, 1
          %s255 = smul.addr %s254, 8
          %s256 = scalar_lea.vmem [#allocation7], %s255
          %258 = dma.done %s253, 128
        $region48: #{tpu_custom_call.1} parent=43 // pred_fallthru
          _
      $region44: #{tpu_custom_call.1} parent=5 // pred_fallthru
        _
    $region6: #{tpu_custom_call.1} parent=1 // loop_footer
      %s19 = sadd.s32 1, %s15
    $region7: #{tpu_custom_call.1} parent=1 // loop_footer_branch
      %14 = sbr.rel target = $region3
    $region8: #{tpu_custom_call.1} parent=1 // loop_exit
      _
    %259 = vsyncpa [#allocation3], 1
    %s260 = scalar_lea.sflag [#allocation3], 1
    %261 = vsyncpa %s260, 1
    %262 = vsyncpa [#allocation6], 1
    %263 = vsyncpa [#allocation4], 1
    %s264 = scalar_lea.sflag [#allocation4], 1
    %265 = vsyncpa %s264, 1

</llo_original>
